<compile_context>
chip_gen: v5e
topology: v5e:2x2
jax: 0.10.0
libtpu: 0.0.40
codegen_flags: <defaults>
</compile_context>

<pallas_src>
import jax
import jax.numpy as jnp
from jax import lax
from jax.experimental import pallas as pl
from jax.experimental.pallas import tpu as pltpu


def _round_up(x, m):
    return (x + m - 1) // m * m


def _patch_embed_kernel(x_ref, w_ref, b_ref, o_ref):
    # x_ref: (tm, K) bf16 flattened patches
    # w_ref: (tn, K) bf16 conv weight rows (contract on K -> no host transpose)
    # b_ref: (1, tn) f32 conv bias
    # o_ref: (tm, tn) output tile
    acc = lax.dot_general(
        x_ref[...],
        w_ref[...],
        dimension_numbers=(((1,), (1,)), ((), ())),
        preferred_element_type=jnp.float32,
    )
    acc = acc + b_ref[...].astype(jnp.float32)
    o_ref[...] = acc.astype(o_ref.dtype)


def patch_embed_forward(x, weight, bias, patch_size, *, compute_dtype=jnp.bfloat16):
    """x: (B, C, H, W); weight: (E, C, P, P); bias: (E,) -> (B, num_patches, E)."""
    B, C, H, W = x.shape
    E = weight.shape[0]
    P = patch_size
    assert H % P == 0 and W % P == 0, "spatial dims must be divisible by patch_size"
    gh, gw = H // P, W // P
    num_patches = gh * gw
    K = C * P * P
    M = B * num_patches

    # --- patch extraction (layout shuffle). With allow_input_fusion below, XLA may fuse
    # this reshape/transpose/cast/pad chain into the kernel's input DMA (no HBM round-trip).
    xp = x.reshape(B, C, gh, P, gw, P)
    xp = jnp.transpose(xp, (0, 2, 4, 1, 3, 5))
    xm = xp.reshape(M, K).astype(compute_dtype)

    # Weight kept as (E, K): contraction on K happens inside the kernel.
    wm = weight.reshape(E, K).astype(compute_dtype)
    bm = bias.reshape(1, E).astype(jnp.float32)

    # Lane-dense N: pad embed dim to a multiple of 128; 256-wide tiles when they fit.
    Np = _round_up(E, 128)
    tn = 256 if (Np >= 256 and Np % 256 == 0) else 128

    # M tiling: big tiles amortize per-step overhead; cap keeps v7x (32 MiB scoped) happy.
    tm = min(1024, _round_up(M, 8))
    Mp = _round_up(M, tm)

    if Mp != M:
        xm = jnp.pad(xm, ((0, Mp - M), (0, 0)))
    if Np != E:
        wm = jnp.pad(wm, ((0, Np - E), (0, 0)))
        bm = jnp.pad(bm, ((0, 0), (0, Np - E)))

    n_tiles = Np // tn
    m_tiles = Mp // tm
    out_dtype = x.dtype

    # Double-buffered tile footprint (+2x headroom), clamped to [32 MiB, 48 MiB]
    # (48 MiB leaves headroom on v7x's 64 MiB physical VMEM; v5e/v6e have 128 MiB).
    tile_bytes = 2 * (
        tm * K * xm.dtype.itemsize
        + tn * K * wm.dtype.itemsize
        + tn * 4
        + tm * tn * jnp.dtype(out_dtype).itemsize
    )
    vmem_limit = int(min(48 * 2**20, max(32 * 2**20, 2 * tile_bytes)))

    out = pl.pallas_call(
        _patch_embed_kernel,
        out_shape=jax.ShapeDtypeStruct((Mp, Np), out_dtype),
        grid_spec=pltpu.PrefetchScalarGridSpec(
            num_scalar_prefetch=0,
            # N outermost: the (tn, K) weight tile + bias stay resident across the M loop.
            grid=(n_tiles, m_tiles),
            in_specs=[
                pl.BlockSpec((tm, K), lambda j, i: (i, 0)),   # patches
                pl.BlockSpec((tn, K), lambda j, i: (j, 0)),   # weight (no re-DMA over M)
                pl.BlockSpec((1, tn), lambda j, i: (0, j)),   # bias
            ],
            out_specs=pl.BlockSpec((tm, tn), lambda j, i: (i, j)),
        ),
        compiler_params=pltpu.CompilerParams(
            dimension_semantics=("parallel", "parallel"),  # both axes shardable (v7x 2 TCs)
            vmem_limit_bytes=vmem_limit,
            allow_input_fusion=[True, True, True],
        ),
    )(xm, wm, bm)

    return out[:M, :E].reshape(B, num_patches, E)


if __name__ == "__main__":
    # Small shapes consistent with the module: img_size=16, patch_size=4,
    # in_chans=4, embed_dim=32, batch=2 -> grid_size=4, num_patches=16.
    B, C, IMG, P, E = 2, 4, 16, 4, 32

    key = jax.random.PRNGKey(0)
    kx, kw, kb = jax.random.split(key, 3)

    x = jax.random.normal(kx, (B, C, IMG, IMG), dtype=jnp.float32)
    # Deterministic synthetic parameters (Conv2d(in_chans, embed_dim, P, stride=P))
    weight = 0.02 * jax.random.normal(kw, (E, C, P, P), dtype=jnp.float32)
    bias = 0.01 * jax.random.normal(kb, (E,), dtype=jnp.float32)

    out = patch_embed_forward(x, weight, bias, P)
    out = jax.block_until_ready(out)

    # Pure-JAX f32 reference (conv via patch-GEMM equivalence).
    gh = IMG // P
    xp = (
        x.reshape(B, C, gh, P, gh, P)
        .transpose(0, 2, 4, 1, 3, 5)
        .reshape(B * gh * gh, C * P * P)
    )
    ref = (xp @ weight.reshape(E, -1).T + bias).reshape(B, gh * gh, E)

    assert out.shape == (B, gh * gh, E)
    # bf16 operands (f32 accumulation) -> loosened tolerance vs. pure-f32 reference.
    assert jnp.allclose(out, ref, atol=2e-2, rtol=2e-2), float(jnp.max(jnp.abs(out - ref)))

    print("KERNEL_OK")
</pallas_src>

<mosaic_0001>
module attributes {stable_mosaic.version = 11 : i64} {
  func.func @_patch_embed_kernel(%arg0: i32, %arg1: i32, %arg2: memref<32x64xbf16, #tpu.memory_space<vmem>>, %arg3: memref<128x64xbf16, #tpu.memory_space<vmem>>, %arg4: memref<1x128xf32, #tpu.memory_space<vmem>>, %arg5: memref<32x128xf32, #tpu.memory_space<vmem>>) attributes {dimension_semantics = [#tpu.dimension_semantics<parallel>, #tpu.dimension_semantics<parallel>], iteration_bounds = array<i64: 1, 1>, scalar_prefetch = 0 : i64, scratch_operands = 0 : i64, tpu.core_type = #tpu.core_type<tc>, window_params = [{transform_indices = @transform_0, window_bounds = array<i64: 32, 64>}, {transform_indices = @transform_1, window_bounds = array<i64: 128, 64>}, {transform_indices = @transform_2, window_bounds = array<i64: 1, 128>}, {transform_indices = @transform_3, window_bounds = array<i64: 32, 128>}]} {
    %c0 = arith.constant 0 : index
    %c0_0 = arith.constant 0 : index
    %0 = vector.load %arg2[%c0, %c0_0] : memref<32x64xbf16, #tpu.memory_space<vmem>>, vector<32x64xbf16>
    %c0_1 = arith.constant 0 : index
    %c0_2 = arith.constant 0 : index
    %1 = vector.load %arg3[%c0_1, %c0_2] : memref<128x64xbf16, #tpu.memory_space<vmem>>, vector<128x64xbf16>
    %cst = arith.constant dense<0.000000e+00> : vector<32x128xf32>
    %2 = tpu.matmul %0, %1, %cst {dimension_numbers = #tpu.dot_dimension_numbers<[1], [1], [0], [0], [0, 0, 1, 0], [], []>} : vector<32x64xbf16>, vector<128x64xbf16>, vector<32x128xf32> -> vector<32x128xf32>
    %c0_3 = arith.constant 0 : index
    %c0_4 = arith.constant 0 : index
    %3 = vector.load %arg4[%c0_3, %c0_4] : memref<1x128xf32, #tpu.memory_space<vmem>>, vector<1x128xf32>
    %4 = vector.broadcast %3 : vector<1x128xf32> to vector<32x128xf32>
    %5 = arith.addf %2, %4 : vector<32x128xf32>
    %c0_5 = arith.constant 0 : index
    %c0_6 = arith.constant 0 : index
    %6 = vector.load %arg5[%c0_5, %c0_6] : memref<32x128xf32, #tpu.memory_space<vmem>>, vector<32x128xf32>
    tpu.vector_store %arg5[%c0_5, %c0_6], %5 {strides = array<i32>} : memref<32x128xf32, #tpu.memory_space<vmem>>, vector<32x128xf32>,
    return
  }
  func.func @transform_0(%arg0: i32, %arg1: i32) -> (i32, i32) {
    %c0_i32 = arith.constant 0 : i32
    %c0_i32_0 = arith.constant 0 : i32
    return %arg1, %c0_i32 : i32, i32
  }
  func.func @transform_1(%arg0: i32, %arg1: i32) -> (i32, i32) {
    %c0_i32 = arith.constant 0 : i32
    %c0_i32_0 = arith.constant 0 : i32
    return %arg0, %c0_i32 : i32, i32
  }
  func.func @transform_2(%arg0: i32, %arg1: i32) -> (i32, i32) {
    %c0_i32 = arith.constant 0 : i32
    %c0_i32_0 = arith.constant 0 : i32
    return %c0_i32, %arg0 : i32, i32
  }
  func.func @transform_3(%arg0: i32, %arg1: i32) -> (i32, i32) {
    %c0_i32 = arith.constant 0 : i32
    return %arg1, %arg0 : i32, i32
  }
}

</mosaic_0001>

<llo_original>
// kernel: tpu_custom_call.1
$region0: #{tpu_custom_call.1}
  #allocation0 [shape = 'u32[]', space=smem, size = 0x4, offset = 0x4, fixed_abs, tag = 'smem constant byte address 0x4 - core index']
  #allocation1 [shape = 'u32[72,128]{1,0:T(1,128)}', space=vmem, size = 0x9000, scoped, tag = 'internal scratch']
  %s0 = inlined_call_operand.vmem [shape: bf16[32,64], index: 0, kind: input, shape index: {}]
  %s1 = inlined_call_operand.vmem [shape: bf16[128,64], index: 1, kind: input, shape index: {}]
  %s2 = inlined_call_operand.vmem [shape: f32[1,128], index: 2, kind: input, shape index: {}]
  %s3 = inlined_call_operand.hbm [shape: f32[32,128], index: 3, kind: output, shape index: {}]
  %s4 = sld [smem:[#allocation0]]
  $region22: #{tpu_custom_call.1} parent=0
    _
  %s6 = ssub.s32 1, %s4
  %s7 = scalar_select 0, %s6, %s4
  $region1: #{tpu_custom_call.1} parent=0
    #allocation2 [shape = 'u8[16384]{0}', space=vmem, size = 0x4000, scoped, tag = 'output window, operand 0, single buffered']
    #allocation3 [shape = 's32[1]{0}', space=sflag, size = 0x4, scoped, tag = 'scoped memory for tpu_custom_call.1']
    %8 = vsyncpa [#allocation3], 0
    // Predicated region
    $region2: #{tpu_custom_call.1} parent=1 // pred_check
      _
    $region3: #{tpu_custom_call.1} parent=1 // pred_check_branch
      %10 = sbr.rel (0) target = $region5
    $region4: #{tpu_custom_call.1} parent=1 // pred_region
      _
    $region5: #{tpu_custom_call.1} parent=1 // pred_fallthru
      _
    // Predicated region
    $region6: #{tpu_custom_call.1} parent=1 // pred_check
      _
    $region7: #{tpu_custom_call.1} parent=1 // pred_check_branch
      %12 = sbr.rel (0) target = $region9
    $region8: #{tpu_custom_call.1} parent=1 // pred_region
      _
    $region9: #{tpu_custom_call.1} parent=1 // pred_fallthru
      _
    // Predicated region
    $region10: #{tpu_custom_call.1} parent=1 // pred_check
      _
    $region11: #{tpu_custom_call.1} parent=1 // pred_check_branch
      %14 = sbr.rel (0) target = $region13
    $region12: #{tpu_custom_call.1} parent=1 // pred_region
      _
    $region13: #{tpu_custom_call.1} parent=1 // pred_fallthru
      _
    %v15 = vld [vmem:[%s0] sm:$0xf]
    %v16 = vld [vmem:[%s0 + $0x4] sm:$0xf]
    %v17 = vld [vmem:[%s0 + $0x8] sm:$0xf]
    %v18 = vld [vmem:[%s0 + $0xc] sm:$0xf]
    %v19 = vld [vmem:[%s1] sm:$0xf]
    %v20 = vld [vmem:[%s1 + $0x4] sm:$0xf]
    %v21 = vld [vmem:[%s1 + $0x8] sm:$0xf]
    %v22 = vld [vmem:[%s1 + $0xc] sm:$0xf]
    %v23 = vld [vmem:[%s1 + $0x10] sm:$0xf]
    %v24 = vld [vmem:[%s1 + $0x14] sm:$0xf]
    %v25 = vld [vmem:[%s1 + $0x18] sm:$0xf]
    %v26 = vld [vmem:[%s1 + $0x1c] sm:$0xf]
    %v27 = vld [vmem:[%s1 + $0x20] sm:$0xf]
    %v28 = vld [vmem:[%s1 + $0x24] sm:$0xf]
    %v29 = vld [vmem:[%s1 + $0x28] sm:$0xf]
    %v30 = vld [vmem:[%s1 + $0x2c] sm:$0xf]
    %v31 = vld [vmem:[%s1 + $0x30] sm:$0xf]
    %v32 = vld [vmem:[%s1 + $0x34] sm:$0xf]
    %v33 = vld [vmem:[%s1 + $0x38] sm:$0xf]
    %v34 = vld [vmem:[%s1 + $0x3c] sm:$0xf]
    %v35 = vld [vmem:[%s2] sm:$0x1]
    %v37 = vperm.slane %v35, 0
    %v43 = vunpack.c.l.b16 %v15
    %v44 = vunpack.c.l.b16 %v16
    %v45 = vunpack.c.l.b16 %v17
    %v46 = vunpack.c.l.b16 %v18
    %v47 = vpack.c.b16 %v44, %v43
    %v48 = vpack.c.b16 %v46, %v45
    %v65 = vunpack.c.l.b16 %v19
    %v66 = vunpack.c.l.b16 %v20
    %v67 = vunpack.c.l.b16 %v21
    %v68 = vunpack.c.l.b16 %v22
    %v69 = vunpack.c.l.b16 %v23
    %v70 = vunpack.c.l.b16 %v24
    %v71 = vunpack.c.l.b16 %v25
    %v72 = vunpack.c.l.b16 %v26
    %v73 = vunpack.c.l.b16 %v27
    %v74 = vunpack.c.l.b16 %v28
    %v75 = vunpack.c.l.b16 %v29
    %v76 = vunpack.c.l.b16 %v30
    %v77 = vunpack.c.l.b16 %v31
    %v78 = vunpack.c.l.b16 %v32
    %v79 = vunpack.c.l.b16 %v33
    %v80 = vunpack.c.l.b16 %v34
    %v81 = vpack.c.b16 %v66, %v65
    %v82 = vpack.c.b16 %v68, %v67
    %v83 = vpack.c.b16 %v70, %v69
    %v84 = vpack.c.b16 %v72, %v71
    %v85 = vpack.c.b16 %v74, %v73
    %v86 = vpack.c.b16 %v76, %v75
    %v87 = vpack.c.b16 %v78, %v77
    %v88 = vpack.c.b16 %v80, %v79
    %vm89 = vcmask 523264
    %v91 = vsel %vm89, %v47, 0
    %v94 = vsel %vm89, %v48, 0
    %v97 = vsel %vm89, %v81, 0
    %v100 = vsel %vm89, %v82, 0
    %v103 = vsel %vm89, %v83, 0
    %v106 = vsel %vm89, %v84, 0
    %v109 = vsel %vm89, %v85, 0
    %v112 = vsel %vm89, %v86, 0
    %v115 = vsel %vm89, %v87, 0
    %v118 = vsel %vm89, %v88, 0
    %120 = vmatpush.bf16.xpose.msra.mxu0 %v118
    %121 = vmatpush.bf16.xpose.msra.mxu0 %v115
    %122 = vmatpush.bf16.xpose.msra.mxu0 %v112
    %123 = vmatpush.bf16.xpose.msra.mxu0 %v109
    %124 = vmatpush.bf16.xpose.msra.mxu0 %v106
    %125 = vmatpush.bf16.xpose.msra.mxu0 %v103
    %126 = vmatpush.bf16.xpose.msra.mxu0 %v100
    %127 = vmatpush.bf16.xpose.msra.mxu0 %v97
    %128 = vmatmul.bf16.gmra.mxu0 %v91
    %v129 = vpop.f32.mrf.mxu0
    %v130 = vadd.f32 %v37, %v129
    %v131 = vpop.f32.mrf.mxu0
    %v132 = vadd.f32 %v37, %v131
    %133 = vmatmul.bf16.gmra.mxu0 %v94
    %v134 = vpop.f32.mrf.mxu0
    %v135 = vadd.f32 %v37, %v134
    %v136 = vpop.f32.mrf.mxu0
    %v137 = vadd.f32 %v37, %v136
    %138 = vdwg.mxu0
    %139 = vst [vmem:[#allocation2] sm:$0xff] %v130
    %140 = vst [vmem:[#allocation2 + $0x8] sm:$0xff] %v132
    %141 = vst [vmem:[#allocation2 + $0x10] sm:$0xff] %v135
    %142 = vst [vmem:[#allocation2 + $0x18] sm:$0xff] %v137
    // Predicated region
    $region14: #{tpu_custom_call.1} parent=1 // pred_check
      _
    $region15: #{tpu_custom_call.1} parent=1 // pred_check_branch
      %144 = sbr.rel (0) target = $region17
    $region16: #{tpu_custom_call.1} parent=1 // pred_region
      %146 = vsyncadd [#allocation3], 0
      %s147 = sshll.u32 [#allocation2], 4
      %s148 = int_to_ptr.vmem [resolvable:$true] %s147
      %s149 = sshll.u32 %s3, 4
      %s150 = int_to_ptr.hbm [resolvable:$true] %s149
      %155 = dma.vmem_to_hbm [thread:$0]  %s148, 512, %s150, [#allocation3], 128, 128, 8
    $region17: #{tpu_custom_call.1} parent=1 // pred_fallthru
      _
    // Predicated region
    $region18: #{tpu_custom_call.1} parent=1 // pred_check
      _
    $region19: #{tpu_custom_call.1} parent=1 // pred_check_branch
      %157 = sbr.rel (0) target = $region21
    $region20: #{tpu_custom_call.1} parent=1 // pred_region
      %159 = dma.done [#allocation3], 512
    $region21: #{tpu_custom_call.1} parent=1 // pred_fallthru
      _
    %160 = vsyncpa [#allocation3], 1

</llo_original>
